<compile_context>
chip_gen: v7x
topology: tpu7x:2x2x1
jax: 0.10.0
libtpu: 0.0.40
codegen_flags: <defaults>
</compile_context>

<pallas_src>
import jax
import jax.numpy as jnp
from jax.experimental import pallas as pl
from jax.experimental.pallas import tpu as pltpu

HIDDEN = 128
EPS = 1e-7


def _round_up(v, m):
    return (v + m - 1) // m * m


def lossv_kernel(x_ref, wd_ref, scal_ref, n_ref, out_ref, m_ref, sw_ref, swp_ref):
    # x:    (T, 128)  VMEM tile of frames (native dtype, cast in-register)
    # wd:   (1, 128)  VMEM   (w[:,1]-w[:,0])/r
    # scal: (2,)      SMEM   [bd = (b1-b0)/r, video_label]
    # n:    (1,)      SMEM   number of valid frames (for tail masking)
    # out:  (1, 1)    VMEM   scalar BCE loss (written on last tile)
    # m/sw/swp: (1,1) VMEM scratch: running max(conf), sum(exp), sum(exp*p1)
    i = pl.program_id(0)
    last = pl.num_programs(0) - 1

    @pl.when(i == 0)
    def _init():
        m_ref[...] = jnp.full_like(m_ref, -jnp.inf)
        sw_ref[...] = jnp.zeros_like(sw_ref)
        swp_ref[...] = jnp.zeros_like(swp_ref)

    bd = scal_ref[0]
    n_valid = n_ref[0]

    x = x_ref[...].astype(jnp.float32)            # (T, 128)
    wd = wd_ref[...].astype(jnp.float32)          # (1, 128)

    # d = (l1 - l0)/r per frame; softmax over 2 classes == sigmoid(d).
    d = jnp.sum(x * wd, axis=-1, keepdims=True) + bd          # (T, 1)
    p1 = 1.0 / (1.0 + jnp.exp(-d))                             # P(class = 1)
    conf = 0.5 + jnp.abs(p1 - 0.5)                             # max(p0, p1)

    # Mask padded tail rows out of the frame-level softmax.
    tile_n = x_ref.shape[0]
    row = i * tile_n + jax.lax.broadcasted_iota(jnp.int32, (tile_n, 1), 0)
    conf = jnp.where(row < n_valid, conf, -jnp.inf)

    # Online softmax over frames: weights_i = exp(conf_i) / sum_j exp(conf_j).
    m_old = m_ref[...]                                         # (1, 1)
    m_new = jnp.maximum(m_old, jnp.max(conf))                  # (1, 1)
    alpha = jnp.exp(m_old - m_new)                             # (1, 1)
    e = jnp.exp(conf - m_new)                                  # (T, 1); 0 on masked rows
    sw_ref[...] = alpha * sw_ref[...] + jnp.sum(e)
    swp_ref[...] = alpha * swp_ref[...] + jnp.sum(e * p1)
    m_ref[...] = m_new

    @pl.when(i == last)
    def _finalize():
        y = scal_ref[1]                                        # video label
        video_prob = swp_ref[...] / sw_ref[...]                # normalization folded here
        p = jnp.clip(video_prob, EPS, 1.0 - EPS)
        loss = -(y * jnp.log(p) + (1.0 - y) * jnp.log(1.0 - p))
        out_ref[...] = loss.astype(out_ref.dtype)


def lossV_forward(x, labels, w, b, r=1.0, tile_n=512):
    """x: (N, 1, 128) or (N, 128) (any float dtype, streamed natively);
    labels: (N,); w: (128, 2) (transpose of torch Linear weight); b: (2,)."""
    if x.ndim == 3:
        x = jnp.squeeze(x, axis=1)                    # matches x.squeeze(1)
    n = x.shape[0]

    w = w.astype(jnp.float32)
    b = b.astype(jnp.float32)
    # Fold class-0 row and the temperature r into one (1,128) weight + scalar bias.
    wd = ((w[:, 1] - w[:, 0]) / r).reshape(1, HIDDEN)
    bd = (b[1] - b[0]) / r

    # video_label is trivial: compute in the wrapper, pass as an SMEM scalar.
    video_label = jnp.round(jnp.mean(labels.astype(jnp.float32)))

    # Tile the frame axis; pad the tail (masked inside the kernel).
    tile_n = min(tile_n, max(16, _round_up(n, 16)))
    n_pad = _round_up(n, tile_n)
    if n_pad != n:
        x = jnp.pad(x, ((0, n_pad - n), (0, 0)))
    num_tiles = n_pad // tile_n

    scalars = jnp.stack([bd, video_label]).astype(jnp.float32)
    n_arr = jnp.asarray([n], dtype=jnp.int32)

    out = pl.pallas_call(
        lossv_kernel,
        out_shape=jax.ShapeDtypeStruct((1, 1), jnp.float32),
        grid_spec=pltpu.PrefetchScalarGridSpec(
            num_scalar_prefetch=0,
            grid=(num_tiles,),
            in_specs=[
                pl.BlockSpec((tile_n, HIDDEN), lambda i: (i, 0)),       # x tile
                pl.BlockSpec((1, HIDDEN), lambda i: (0, 0)),            # wd
                pl.BlockSpec(memory_space=pltpu.MemorySpace.SMEM),      # [bd, y]
                pl.BlockSpec(memory_space=pltpu.MemorySpace.SMEM),      # [n]
            ],
            out_specs=pl.BlockSpec((1, 1), lambda i: (0, 0)),
            scratch_shapes=[pltpu.VMEM((1, 1), jnp.float32)] * 3,
        ),
        compiler_params=pltpu.CompilerParams(
            dimension_semantics=("arbitrary",),   # frame axis is a reduction
        ),
    )(x, wd, scalars, n_arr)
    return out[0, 0]


def _reference(x, labels, w, b, r=1.0):
    """Plain-JAX reference of lossV.forward (weighted_avg), full softmax path."""
    if x.ndim == 3:
        x = jnp.squeeze(x, axis=1)
    logits = (x.astype(jnp.float32) @ w.astype(jnp.float32)
              + b.astype(jnp.float32).reshape(1, 2)) / r
    probs = jax.nn.softmax(logits, axis=-1)
    conf = jnp.max(probs, axis=1)
    weights = jax.nn.softmax(conf, axis=0)
    video_prob = jnp.sum(weights * probs[:, 1])
    video_label = jnp.round(jnp.mean(labels.astype(jnp.float32)))
    p = jnp.clip(video_prob, EPS, 1.0 - EPS)
    return -(video_label * jnp.log(p) + (1.0 - video_label) * jnp.log(1.0 - p))


if __name__ == "__main__":
    key = jax.random.PRNGKey(0)
    k_x, k_w, k_b, k_l, k_x2, k_l2 = jax.random.split(key, 6)

    # deterministic nn.Linear(128, 2)-style init: U(-1/sqrt(128), 1/sqrt(128))
    bound = 1.0 / (HIDDEN ** 0.5)
    w = jax.random.uniform(k_w, (HIDDEN, 2), jnp.float32, -bound, bound)
    b = jax.random.uniform(k_b, (2,), jnp.float32, -bound, bound)

    # case 1: tiny clip, single tile; input mimics (frame_num, 1, 128) pre-squeeze
    n1 = 8
    x1 = jax.random.normal(k_x, (n1, 1, HIDDEN), dtype=jnp.float32)
    l1 = jax.random.bernoulli(k_l, 0.5, (n1,)).astype(jnp.float32)
    out1 = jax.block_until_ready(lossV_forward(x1, l1, w, b, r=1.0))
    ref1 = _reference(x1, l1, w, b, r=1.0)
    assert jnp.allclose(out1, ref1, atol=1e-5, rtol=1e-5), (out1, ref1)

    # case 2: multi-tile grid with a masked ragged tail (3 tiles of 128, 84 padded rows)
    n2 = 300
    x2 = jax.random.normal(k_x2, (n2, 1, HIDDEN), dtype=jnp.float32)
    l2 = jax.random.bernoulli(k_l2, 0.5, (n2,)).astype(jnp.float32)
    out2 = jax.block_until_ready(lossV_forward(x2, l2, w, b, r=2.0, tile_n=128))
    ref2 = _reference(x2, l2, w, b, r=2.0)
    assert jnp.allclose(out2, ref2, atol=1e-5, rtol=1e-5), (out2, ref2)

    # TODO(synk): optional v7x-only 2-TensorCore split of the frame stream (leading
    # "parallel" grid axis with per-core partial accumulators) is not implemented.
    print("KERNEL_OK")
</pallas_src>

<mosaic_0001>
module attributes {stable_mosaic.version = 11 : i64} {
  func.func @lossv_kernel(%arg0: i32, %arg1: memref<16x128xf32, #tpu.memory_space<vmem>>, %arg2: memref<1x128xf32, #tpu.memory_space<vmem>>, %arg3: memref<2xf32, #tpu.memory_space<smem>>, %arg4: memref<1xi32, #tpu.memory_space<smem>>, %arg5: memref<1x1xf32, #tpu.memory_space<vmem>>, %arg6: memref<1x1xf32, #tpu.memory_space<vmem>>, %arg7: memref<1x1xf32, #tpu.memory_space<vmem>>, %arg8: memref<1x1xf32, #tpu.memory_space<vmem>>) attributes {dimension_semantics = [#tpu.dimension_semantics<arbitrary>], iteration_bounds = array<i64: 1>, scalar_prefetch = 0 : i64, scratch_operands = 3 : i64, tpu.core_type = #tpu.core_type<tc>, window_params = [{transform_indices = @transform_0, window_bounds = array<i64: 16, 128>}, {pipeline_mode = #tpu.pipeline_mode<synchronous>, transform_indices = @transform_1, window_bounds = array<i64: 1, 128>}, {transform_indices = @transform_2, window_bounds = array<i64: 2>}, {transform_indices = @transform_3, window_bounds = array<i64: 1>}, {pipeline_mode = #tpu.pipeline_mode<synchronous>, transform_indices = @transform_4, window_bounds = array<i64: 1, 1>}]} {
    %c0_i32 = arith.constant 0 : i32
    %0 = arith.cmpi eq, %arg0, %c0_i32 : i32
    %1 = arith.extui %0 : i1 to i32
    %c0_i32_0 = arith.constant 0 : i32
    %2 = arith.cmpi ne, %1, %c0_i32_0 : i32
    scf.if %2 {
      %cst_29 = arith.constant 0xFF800000 : f32
      %68 = vector.broadcast %cst_29 : f32 to vector<1x1xf32>
      %c0_30 = arith.constant 0 : index
      %c0_31 = arith.constant 0 : index
      %69 = vector.load %arg6[%c0_30, %c0_31] : memref<1x1xf32, #tpu.memory_space<vmem>>, vector<1x1xf32>
      tpu.vector_store %arg6[%c0_30, %c0_31], %68 {strides = array<i32>} : memref<1x1xf32, #tpu.memory_space<vmem>>, vector<1x1xf32>,
      %cst_32 = arith.constant 0.000000e+00 : f32
      %70 = vector.broadcast %cst_32 : f32 to vector<1x1xf32>
      %c0_33 = arith.constant 0 : index
      %c0_34 = arith.constant 0 : index
      %71 = vector.load %arg7[%c0_33, %c0_34] : memref<1x1xf32, #tpu.memory_space<vmem>>, vector<1x1xf32>
      tpu.vector_store %arg7[%c0_33, %c0_34], %70 {strides = array<i32>} : memref<1x1xf32, #tpu.memory_space<vmem>>, vector<1x1xf32>,
      %cst_35 = arith.constant 0.000000e+00 : f32
      %72 = vector.broadcast %cst_35 : f32 to vector<1x1xf32>
      %c0_36 = arith.constant 0 : index
      %c0_37 = arith.constant 0 : index
      %73 = vector.load %arg8[%c0_36, %c0_37] : memref<1x1xf32, #tpu.memory_space<vmem>>, vector<1x1xf32>
      tpu.vector_store %arg8[%c0_36, %c0_37], %72 {strides = array<i32>} : memref<1x1xf32, #tpu.memory_space<vmem>>, vector<1x1xf32>,
    } else {
    }
    %c0 = arith.constant 0 : index
    %3 = memref.load %arg3[%c0] : memref<2xf32, #tpu.memory_space<smem>>
    %c0_1 = arith.constant 0 : index
    %4 = memref.load %arg4[%c0_1] : memref<1xi32, #tpu.memory_space<smem>>
    %c0_2 = arith.constant 0 : index
    %c0_3 = arith.constant 0 : index
    %5 = vector.load %arg1[%c0_2, %c0_3] : memref<16x128xf32, #tpu.memory_space<vmem>>, vector<16x128xf32>
    %c0_4 = arith.constant 0 : index
    %c0_5 = arith.constant 0 : index
    %6 = vector.load %arg2[%c0_4, %c0_5] : memref<1x128xf32, #tpu.memory_space<vmem>>, vector<1x128xf32>
    %7 = vector.broadcast %6 : vector<1x128xf32> to vector<16x128xf32>
    %8 = arith.mulf %5, %7 : vector<16x128xf32>
    %cst = arith.constant dense<0.000000e+00> : vector<16xf32>
    %9 = vector.multi_reduction <add>, %8, %cst [1] : vector<16x128xf32> to vector<16xf32>
    %10 = vector.shape_cast %9 : vector<16xf32> to vector<16x1xf32>
    %11 = vector.broadcast %3 : f32 to vector<16x1xf32>
    %12 = arith.addf %10, %11 : vector<16x1xf32>
    %cst_6 = arith.constant 0.000000e+00 : f32
    %13 = vector.broadcast %cst_6 : f32 to vector<16x1xf32>
    %14 = arith.subf %13, %12 : vector<16x1xf32>
    %15 = math.exp %14 : vector<16x1xf32>
    %cst_7 = arith.constant 1.000000e+00 : f32
    %16 = vector.broadcast %cst_7 : f32 to vector<16x1xf32>
    %17 = arith.addf %16, %15 : vector<16x1xf32>
    %cst_8 = arith.constant 1.000000e+00 : f32
    %18 = vector.broadcast %cst_8 : f32 to vector<16x1xf32>
    %19 = arith.divf %18, %17 : vector<16x1xf32>
    %cst_9 = arith.constant 5.000000e-01 : f32
    %20 = vector.broadcast %cst_9 : f32 to vector<16x1xf32>
    %21 = arith.subf %19, %20 : vector<16x1xf32>
    %22 = math.absf %21 : vector<16x1xf32>
    %cst_10 = arith.constant 5.000000e-01 : f32
    %23 = vector.broadcast %cst_10 : f32 to vector<16x1xf32>
    %24 = arith.addf %23, %22 : vector<16x1xf32>
    %c16_i32 = arith.constant 16 : i32
    %25 = arith.muli %arg0, %c16_i32 : i32
    %26 = tpu.iota {dimensions = array<i32: 0>} : vector<16x1xi32>
    %27 = vector.broadcast %25 : i32 to vector<16x1xi32>
    %28 = arith.addi %27, %26 : vector<16x1xi32>
    %29 = vector.broadcast %4 : i32 to vector<16x1xi32>
    %30 = arith.cmpi slt, %28, %29 : vector<16x1xi32>
    %cst_11 = arith.constant 0xFF800000 : f32
    %31 = vector.broadcast %cst_11 : f32 to vector<16x1xf32>
    %32 = arith.select %30, %24, %31 : vector<16x1xi1>, vector<16x1xf32>
    %c0_12 = arith.constant 0 : index
    %c0_13 = arith.constant 0 : index
    %33 = vector.load %arg6[%c0_12, %c0_13] : memref<1x1xf32, #tpu.memory_space<vmem>>, vector<1x1xf32>
    %34 = vector.shape_cast %32 : vector<16x1xf32> to vector<1x16x1xf32>
    %cst_14 = arith.constant dense<0xFF800000> : vector<1xf32>
    %35 = vector.multi_reduction <maximumf>, %34, %cst_14 [1, 2] : vector<1x16x1xf32> to vector<1xf32>
    %36 = vector.shape_cast %35 : vector<1xf32> to vector<1x1x1xf32>
    %37 = vector.extract %36[0, 0, 0] : f32 from vector<1x1x1xf32>
    %38 = vector.broadcast %37 : f32 to vector<1x1xf32>
    %39 = arith.maximumf %33, %38 : vector<1x1xf32>
    %40 = arith.subf %33, %39 : vector<1x1xf32>
    %41 = math.exp %40 : vector<1x1xf32>
    %42 = vector.broadcast %39 : vector<1x1xf32> to vector<16x1xf32>
    %43 = arith.subf %32, %42 : vector<16x1xf32>
    %44 = math.exp %43 : vector<16x1xf32>
    %c0_15 = arith.constant 0 : index
    %c0_16 = arith.constant 0 : index
    %45 = vector.load %arg7[%c0_15, %c0_16] : memref<1x1xf32, #tpu.memory_space<vmem>>, vector<1x1xf32>
    %46 = arith.mulf %41, %45 : vector<1x1xf32>
    %47 = vector.shape_cast %44 : vector<16x1xf32> to vector<1x16x1xf32>
    %cst_17 = arith.constant dense<0.000000e+00> : vector<1xf32>
    %48 = vector.multi_reduction <add>, %47, %cst_17 [1, 2] : vector<1x16x1xf32> to vector<1xf32>
    %49 = vector.shape_cast %48 : vector<1xf32> to vector<1x1x1xf32>
    %50 = vector.extract %49[0, 0, 0] : f32 from vector<1x1x1xf32>
    %51 = vector.broadcast %50 : f32 to vector<1x1xf32>
    %52 = arith.addf %46, %51 : vector<1x1xf32>
    %c0_18 = arith.constant 0 : index
    %c0_19 = arith.constant 0 : index
    %53 = vector.load %arg7[%c0_18, %c0_19] : memref<1x1xf32, #tpu.memory_space<vmem>>, vector<1x1xf32>
    tpu.vector_store %arg7[%c0_18, %c0_19], %52 {strides = array<i32>} : memref<1x1xf32, #tpu.memory_space<vmem>>, vector<1x1xf32>,
    %c0_20 = arith.constant 0 : index
    %c0_21 = arith.constant 0 : index
    %54 = vector.load %arg8[%c0_20, %c0_21] : memref<1x1xf32, #tpu.memory_space<vmem>>, vector<1x1xf32>
    %55 = arith.mulf %41, %54 : vector<1x1xf32>
    %56 = arith.mulf %44, %19 : vector<16x1xf32>
    %57 = vector.shape_cast %56 : vector<16x1xf32> to vector<1x16x1xf32>
    %cst_22 = arith.constant dense<0.000000e+00> : vector<1xf32>
    %58 = vector.multi_reduction <add>, %57, %cst_22 [1, 2] : vector<1x16x1xf32> to vector<1xf32>
    %59 = vector.shape_cast %58 : vector<1xf32> to vector<1x1x1xf32>
    %60 = vector.extract %59[0, 0, 0] : f32 from vector<1x1x1xf32>
    %61 = vector.broadcast %60 : f32 to vector<1x1xf32>
    %62 = arith.addf %55, %61 : vector<1x1xf32>
    %c0_23 = arith.constant 0 : index
    %c0_24 = arith.constant 0 : index
    %63 = vector.load %arg8[%c0_23, %c0_24] : memref<1x1xf32, #tpu.memory_space<vmem>>, vector<1x1xf32>
    tpu.vector_store %arg8[%c0_23, %c0_24], %62 {strides = array<i32>} : memref<1x1xf32, #tpu.memory_space<vmem>>, vector<1x1xf32>,
    %c0_25 = arith.constant 0 : index
    %c0_26 = arith.constant 0 : index
    %64 = vector.load %arg6[%c0_25, %c0_26] : memref<1x1xf32, #tpu.memory_space<vmem>>, vector<1x1xf32>
    tpu.vector_store %arg6[%c0_25, %c0_26], %39 {strides = array<i32>} : memref<1x1xf32, #tpu.memory_space<vmem>>, vector<1x1xf32>,
    %c0_i32_27 = arith.constant 0 : i32
    %65 = arith.cmpi eq, %arg0, %c0_i32_27 : i32
    %66 = arith.extui %65 : i1 to i32
    %c0_i32_28 = arith.constant 0 : i32
    %67 = arith.cmpi ne, %66, %c0_i32_28 : i32
    scf.if %67 {
      %c1 = arith.constant 1 : index
      %68 = memref.load %arg3[%c1] : memref<2xf32, #tpu.memory_space<smem>>
      %c0_29 = arith.constant 0 : index
      %c0_30 = arith.constant 0 : index
      %69 = vector.load %arg8[%c0_29, %c0_30] : memref<1x1xf32, #tpu.memory_space<vmem>>, vector<1x1xf32>
      %c0_31 = arith.constant 0 : index
      %c0_32 = arith.constant 0 : index
      %70 = vector.load %arg7[%c0_31, %c0_32] : memref<1x1xf32, #tpu.memory_space<vmem>>, vector<1x1xf32>
      %71 = arith.divf %69, %70 : vector<1x1xf32>
      %cst_33 = arith.constant 1.000000e-07 : f32
      %cst_34 = arith.constant 0.99999988 : f32
      %72 = vector.broadcast %cst_33 : f32 to vector<1x1xf32>
      %73 = arith.maximumf %72, %71 : vector<1x1xf32>
      %74 = vector.broadcast %cst_34 : f32 to vector<1x1xf32>
      %75 = arith.minimumf %74, %73 : vector<1x1xf32>
      %76 = math.log %75 : vector<1x1xf32>
      %77 = vector.broadcast %68 : f32 to vector<1x1xf32>
      %78 = arith.mulf %77, %76 : vector<1x1xf32>
      %cst_35 = arith.constant 1.000000e+00 : f32
      %79 = arith.subf %cst_35, %68 : f32
      %cst_36 = arith.constant 1.000000e+00 : f32
      %80 = vector.broadcast %cst_36 : f32 to vector<1x1xf32>
      %81 = arith.subf %80, %75 : vector<1x1xf32>
      %82 = math.log %81 : vector<1x1xf32>
      %83 = vector.broadcast %79 : f32 to vector<1x1xf32>
      %84 = arith.mulf %83, %82 : vector<1x1xf32>
      %85 = arith.addf %78, %84 : vector<1x1xf32>
      %cst_37 = arith.constant 0.000000e+00 : f32
      %86 = vector.broadcast %cst_37 : f32 to vector<1x1xf32>
      %87 = arith.subf %86, %85 : vector<1x1xf32>
      %c0_38 = arith.constant 0 : index
      %c0_39 = arith.constant 0 : index
      %88 = vector.load %arg5[%c0_38, %c0_39] : memref<1x1xf32, #tpu.memory_space<vmem>>, vector<1x1xf32>
      tpu.vector_store %arg5[%c0_38, %c0_39], %87 {strides = array<i32>} : memref<1x1xf32, #tpu.memory_space<vmem>>, vector<1x1xf32>,
    } else {
    }
    return
  }
  func.func @transform_0(%arg0: i32) -> (i32, i32) {
    %c0_i32 = arith.constant 0 : i32
    %c0_i32_0 = arith.constant 0 : i32
    return %arg0, %c0_i32 : i32, i32
  }
  func.func @transform_1(%arg0: i32) -> (i32, i32) {
    %c0_i32 = arith.constant 0 : i32
    %c0_i32_0 = arith.constant 0 : i32
    %c0_i32_1 = arith.constant 0 : i32
    return %c0_i32, %c0_i32_0 : i32, i32
  }
  func.func @transform_2(%arg0: i32) -> i32 {
    %c0_i32 = arith.constant 0 : i32
    %c0_i32_0 = arith.constant 0 : i32
    return %c0_i32 : i32
  }
  func.func @transform_3(%arg0: i32) -> i32 {
    %c0_i32 = arith.constant 0 : i32
    %c0_i32_0 = arith.constant 0 : i32
    return %c0_i32 : i32
  }
  func.func @transform_4(%arg0: i32) -> (i32, i32) {
    %c0_i32 = arith.constant 0 : i32
    %c0_i32_0 = arith.constant 0 : i32
    %c0_i32_1 = arith.constant 0 : i32
    return %c0_i32, %c0_i32_0 : i32, i32
  }
}

</mosaic_0001>

<llo_original>
// kernel: tpu_custom_call.1
$region0: #{tpu_custom_call.1}
  #allocation0 [shape = 'u32[]', space=smem, size = 0x4, offset = 0x4, fixed_abs, tag = 'smem constant byte address 0x4 - core index']
  #allocation1 [shape = 'u32[144,128]{1,0:T(1,128)}', space=vmem, size = 0x12000, scoped, tag = 'internal scratch']
  #allocation2 [shape = 'f32[1,1]{1,0:T(1,128)}', space=vmem, size = 0x200, scoped, tag = 'scratch operand']
  #allocation3 [shape = 'f32[1,1]{1,0:T(1,128)}', space=vmem, size = 0x200, scoped, tag = 'scratch operand']
  #allocation4 [shape = 'f32[1,1]{1,0:T(1,128)}', space=vmem, size = 0x200, scoped, tag = 'scratch operand']
  #allocation5 [shape = 's32[1]{0:T(128)S(6)}', space=smem, size = 0x200, scoped, tag = 'scoped memory for tpu_custom_call.1']
  %s0 = inlined_call_operand.hbm [shape: f32[16,128], index: 0, kind: input, shape index: {}]
  %s1 = inlined_call_operand.vmem [shape: f32[1,128], index: 1, kind: input, shape index: {}]
  %s2 = inlined_call_operand.vmem [shape: f32[2], index: 2, kind: input, shape index: {}]
  %s3 = inlined_call_operand.<no memory space> [shape: s32[1], index: 3, kind: input, shape index: {}]
  %s4 = inlined_call_operand.hbm [shape: f32[1,1], index: 4, kind: output, shape index: {}]
  %s5 = sld [smem:[#allocation0]]
  $region42: #{tpu_custom_call.1} parent=0
    _
  %s7 = ssub.s32 1, %s5
  %s8 = scalar_select 0, %s7, %s5
  %9 = sst [smem:[#allocation5]] %s3
  $region1: #{tpu_custom_call.1} parent=0
    #allocation6 [shape = 'u8[8192]{0}', space=vmem, size = 0x2000, scoped, tag = 'input window, operand 0, single buffered']
    #allocation7 [shape = 's32[1]{0}', space=sflag, size = 0x4, scoped, tag = 'scoped memory for tpu_custom_call.1']
    #allocation8 [shape = 's32[1]{0}', space=sflag, size = 0x4, scoped, tag = 'scoped memory for tpu_custom_call.1']
    #allocation9 [shape = 's32[1]{0}', space=sflag, size = 0x4, scoped, tag = 'scoped memory for tpu_custom_call.1']
    #allocation10 [shape = 'u8[512]{0}', space=smem, size = 0x200, scoped, tag = 'input window, operand 2, single buffered']
    #allocation11 [shape = 'u8[512]{0}', space=vmem, size = 0x400, scoped, tag = 'output window, operand 0, single buffered']
    %10 = vsyncpa [#allocation7], 0
    %11 = vsyncpa [#allocation9], 0
    %12 = vsyncpa [#allocation8], 0
    // Predicated region
    $region2: #{tpu_custom_call.1} parent=1 // pred_check
      _
    $region3: #{tpu_custom_call.1} parent=1 // pred_check_branch
      %14 = sbr.rel (0) target = $region5
    $region4: #{tpu_custom_call.1} parent=1 // pred_region
      %s16 = ssub.s32 256, 256
      %17 = vsyncadd [#allocation7], %s16
      %s18 = sshll.u32 [#allocation6], 4
      %s19 = int_to_ptr.vmem [resolvable:$true] %s18
      %24 = dma.hbm_to_vmem [thread:$0]  %s0, 256, %s19, [#allocation7], 128, 128, 8
    $region5: #{tpu_custom_call.1} parent=1 // pred_fallthru
      _
    // Predicated region
    $region6: #{tpu_custom_call.1} parent=1 // pred_check
      _
    $region7: #{tpu_custom_call.1} parent=1 // pred_check_branch
      %26 = sbr.rel (0) target = $region9
    $region8: #{tpu_custom_call.1} parent=1 // pred_region
      _
    $region9: #{tpu_custom_call.1} parent=1 // pred_fallthru
      _
    // Predicated region
    $region10: #{tpu_custom_call.1} parent=1 // pred_check
      _
    $region11: #{tpu_custom_call.1} parent=1 // pred_check_branch
      %28 = sbr.rel (0) target = $region13
    $region12: #{tpu_custom_call.1} parent=1 // pred_region
      %s30 = ssub.s32 16, 16
      %31 = vsyncadd [#allocation9], %s30
      %s33 = sshll.u32 %s2, 4
      %s34 = int_to_ptr.vmem [resolvable:$true] %s33
      %36 = dma.vmem_to_smem %s34, 16, [#allocation10], [#allocation9]
    $region13: #{tpu_custom_call.1} parent=1 // pred_fallthru
      _
    // Predicated region
    $region14: #{tpu_custom_call.1} parent=1 // pred_check
      _
    $region15: #{tpu_custom_call.1} parent=1 // pred_check_branch
      %38 = sbr.rel (0) target = $region17
    $region16: #{tpu_custom_call.1} parent=1 // pred_region
      _
    $region17: #{tpu_custom_call.1} parent=1 // pred_fallthru
      _
    // Predicated region
    $region18: #{tpu_custom_call.1} parent=1 // pred_check
      _
    $region19: #{tpu_custom_call.1} parent=1 // pred_check_branch
      %40 = sbr.rel (0) target = $region21
    $region20: #{tpu_custom_call.1} parent=1 // pred_region
      %41 = dma.done [#allocation7], 256
    $region21: #{tpu_custom_call.1} parent=1 // pred_fallthru
      _
    // Predicated region
    $region22: #{tpu_custom_call.1} parent=1 // pred_check
      _
    $region23: #{tpu_custom_call.1} parent=1 // pred_check_branch
      %43 = sbr.rel (0) target = $region25
    $region24: #{tpu_custom_call.1} parent=1 // pred_region
      %44 = dma.done [#allocation9], 16
    $region25: #{tpu_custom_call.1} parent=1 // pred_fallthru
      _
    %45 = sfence
    %p46 = scmp.eq.s32.totalorder 0, 0
    // Predicated region
    $region26: #{tpu_custom_call.1} parent=1 // pred_check
      %p47 = pneg %p46
    $region27: #{tpu_custom_call.1} parent=1 // pred_check_branch
      %49 = sbr.rel (%p47) target = $region29
    $region28: #{tpu_custom_call.1} parent=1 // pred_region
      %vm50 = vcmask 0
      %51 = vst.msk [vmem:[#allocation2] sm:$0x1] %vm50, -inf
      %52 = vst.msk [vmem:[#allocation3] sm:$0x1] %vm50, 0.0
      %53 = vst.msk [vmem:[#allocation4] sm:$0x1] %vm50, 0.0
    $region29: #{tpu_custom_call.1} parent=1 // pred_fallthru
      _
    %s54 = sld [smem:[#allocation10]]
    %s55 = sld [smem:[#allocation5]]
    %v56 = vld [vmem:[#allocation6] sm:$0xff]
    %v57 = vld [vmem:[#allocation6 + $0x8] sm:$0xff]
    %v58 = vld [vmem:[%s1] sm:$0x1]
    %v60 = vlaneseq
    %v61 = vshrl.u32 %v60, 7
    %v62 = vsub.s32 0, %v61
    %v63 = vrot.slane %v58, %v62
    %v65 = vmul.f32 %v56, %v63
    %v66 = vmul.f32 %v57, %v63
    %67 = vadd.xlane.f32.xlu0 %v65
    %v68 = vpop.xlane.xlu0 %67
    %69 = vadd.xlane.f32.xlu0 %v66
    %v70 = vpop.xlane.xlu0 %69
    %v71 = vstv %s54
    %v72 = vadd.f32 %v68, %v71
    %v73 = vadd.f32 %v70, %v71
    %v74 = vsub.f32 0.0, %v72
    %v75 = vsub.f32 0.0, %v73
    %v76 = vmul.f32 %v74, 1.442695
    %v77 = vpow.pop %v76
    %v78 = vmul.f32 %v75, 1.442695
    %v79 = vpow.pop %v78
    %v80 = vadd.f32 %v77, 1.0
    %v81 = vadd.f32 %v79, 1.0
    %v82 = vrcp.pop %v80
    %v83 = vmul.f32 1.0, %v82
    %v84 = vrcp.pop %v81
    %v85 = vmul.f32 1.0, %v84
    %v86 = vsub.f32 %v83, 0.5
    %v87 = vsub.f32 %v85, 0.5
    %v88 = vand.u32 2147483647, %v86
    %v89 = vand.u32 2147483647, %v87
    %v90 = vadd.f32 %v88, 0.5
    %v91 = vadd.f32 %v89, 0.5
    %s92 = smul.u32 0, 16
    %v93 = vlaneseq
    %v94 = vshrl.u32 %v93, 7
    %v95 = vadd.s32 %v94, 8
    %v96 = vstv %s92
    %v97 = vadd.s32 %v96, %v94
    %v98 = vadd.s32 %v96, %v95
    %v99 = vstv %s55
    %vm100 = vcmp.lt.s32.totalorder %v97, %v99
    %vm101 = vcmp.lt.s32.totalorder %v98, %v99
    %v102 = vsel %vm100, %v90, -inf
    %v103 = vsel %vm101, %v91, -inf
    %v104 = vld [vmem:[#allocation2] sm:$0x1]
    %v105 = vmax.f32 %v102, %v103
    %v106 = vrot.slane %v105, 4
    %v107 = vmax.f32 %v105, %v106
    %v108 = vrot.slane %v107, 2
    %v109 = vmax.f32 %v107, %v108
    %v110 = vrot.slane %v109, 1
    %v111 = vmax.f32 %v109, %v110
    %s112 = vtos %v111
    %v113 = vstv %s112
    %v114 = vmax.f32 %v104, %v113
    %v115 = vsub.f32 %v104, %v114
    %v116 = vmul.f32 %v115, 1.442695
    %v117 = vpow.pop %v116
    %v119 = vlaneseq
    %v120 = vshrl.u32 %v119, 7
    %v121 = vsub.s32 0, %v120
    %v122 = vrot.slane %v114, %v121
    %v124 = vsub.f32 %v102, %v122
    %v125 = vsub.f32 %v103, %v122
    %v126 = vmul.f32 %v124, 1.442695
    %v127 = vpow.pop %v126
    %v128 = vmul.f32 %v125, 1.442695
    %v129 = vpow.pop %v128
    %v130 = vld [vmem:[#allocation3] sm:$0x1]
    %v131 = vmul.f32 %v117, %v130
    %vm132 = vcmask 7168
    %v133 = vsel %vm132, %v127, 0.0
    %v134 = vsel %vm132, %v129, 0.0
    %v135 = vadd.f32 %v133, %v134
    %136 = vadd.xlane.f32.xlu0 %v135
    %v137 = vpop.xlane.xlu0 %136
    %v138 = vrot.slane %v137, 4
    %v139 = vadd.f32 %v137, %v138
    %v140 = vrot.slane %v139, 2
    %v141 = vadd.f32 %v139, %v140
    %v142 = vrot.slane %v141, 1
    %v143 = vadd.f32 %v141, %v142
    %s144 = vtos %v143
    %v145 = vstv %s144
    %v146 = vadd.f32 %v131, %v145
    %vm147 = vcmask 0
    %148 = vst.msk [vmem:[#allocation3] sm:$0x1] %vm147, %v146
    %v149 = vld [vmem:[#allocation4] sm:$0x1]
    %v150 = vmul.f32 %v117, %v149
    %v151 = vmul.f32 %v127, %v83
    %v152 = vmul.f32 %v129, %v85
    %v153 = vsel %vm132, %v151, 0.0
    %v154 = vsel %vm132, %v152, 0.0
    %v155 = vadd.f32 %v153, %v154
    %156 = vadd.xlane.f32.xlu0 %v155
    %v157 = vpop.xlane.xlu0 %156
    %v158 = vrot.slane %v157, 4
    %v159 = vadd.f32 %v157, %v158
    %v160 = vrot.slane %v159, 2
    %v161 = vadd.f32 %v159, %v160
    %v162 = vrot.slane %v161, 1
    %v163 = vadd.f32 %v161, %v162
    %s164 = vtos %v163
    %v165 = vstv %s164
    %v166 = vadd.f32 %v150, %v165
    %167 = vst.msk [vmem:[#allocation4] sm:$0x1] %vm147, %v166
    %168 = vst.msk [vmem:[#allocation2] sm:$0x1] %vm147, %v114
    // Predicated region
    $region30: #{tpu_custom_call.1} parent=1 // pred_check
      %p169 = pneg %p46
    $region31: #{tpu_custom_call.1} parent=1 // pred_check_branch
      %171 = sbr.rel (%p169) target = $region33
    $region32: #{tpu_custom_call.1} parent=1 // pred_region
      %s172 = sld [smem:[#allocation10 + $0x1]]
      %v173 = vld [vmem:[#allocation4] sm:$0x1]
      %v174 = vld [vmem:[#allocation3] sm:$0x1]
      %v175 = vrcp.pop %v174
      %v176 = vmul.f32 %v173, %v175
      %v177 = vmax.f32 %v176, 1e-07
      %v178 = vmin.f32 %v177, 0.9999999
      %v179 = vlog2.pop %v178
      %v180 = vmul.f32 %v179, 0.6931472
      %v181 = vstv %s172
      %v182 = vmul.f32 %v181, %v180
      %s183 = ssub.f32 1.0, %s172
      %v184 = vsub.f32 1.0, %v178
      %v185 = vlog2.pop %v184
      %v186 = vmul.f32 %v185, 0.6931472
      %v187 = vstv %s183
      %v188 = vmul.f32 %v187, %v186
      %v189 = vadd.f32 %v182, %v188
      %v190 = vsub.f32 0.0, %v189
      %191 = vst.msk [vmem:[#allocation11] sm:$0x1] %vm147, %v190
    $region33: #{tpu_custom_call.1} parent=1 // pred_fallthru
      _
    // Predicated region
    $region34: #{tpu_custom_call.1} parent=1 // pred_check
      _
    $region35: #{tpu_custom_call.1} parent=1 // pred_check_branch
      %193 = sbr.rel (0) target = $region37
    $region36: #{tpu_custom_call.1} parent=1 // pred_region
      %s195 = ssub.s32 16, 16
      %196 = vsyncadd [#allocation8], %s195
      %s198 = sshll.u32 [#allocation11], 4
      %s199 = int_to_ptr.vmem [resolvable:$true] %s198
      %201 = dma.vmem_to_hbm [thread:$0]  %s199, 16, %s4, [#allocation8]
    $region37: #{tpu_custom_call.1} parent=1 // pred_fallthru
      _
    // Predicated region
    $region38: #{tpu_custom_call.1} parent=1 // pred_check
      _
    $region39: #{tpu_custom_call.1} parent=1 // pred_check_branch
      %203 = sbr.rel (0) target = $region41
    $region40: #{tpu_custom_call.1} parent=1 // pred_region
      %204 = dma.done [#allocation8], 16
    $region41: #{tpu_custom_call.1} parent=1 // pred_fallthru
      _
    %205 = vsyncpa [#allocation7], 1
    %206 = vsyncpa [#allocation8], 1
    %207 = vsyncpa [#allocation9], 1

</llo_original>
